<compile_context>
chip_gen: v6e
topology: v6e:2x2x1
jax: 0.10.0
libtpu: 0.0.40
codegen_flags: <defaults>
</compile_context>

<pallas_src>
import functools

import jax
import jax.numpy as jnp
from jax.experimental import pallas as pl
from jax.experimental.pallas import tpu as pltpu

_NORM_EPS = 1e-12          # F.normalize eps
_COS_EPS = 1e-8            # F.cosine_similarity eps (clamp on product of norms)
_FAST_PATH_BYTES = 256 << 10   # below this per array, plain JAX wins
_MIN_BLOCK_BYTES = 2 << 20     # target per-input block size window: 2-8 MiB
_MAX_BLOCK_BYTES = 8 << 20


def _plain_jax_loss(old_feat, new_feat):
    """Reference / fast-path implementation (matches the PyTorch module)."""
    old = old_feat.astype(jnp.float32)
    new = new_feat.astype(jnp.float32)
    on = old / jnp.maximum(
        jnp.linalg.norm(old, axis=1, keepdims=True), _NORM_EPS)
    nn_ = new / jnp.maximum(
        jnp.linalg.norm(new, axis=1, keepdims=True), _NORM_EPS)
    dot = jnp.sum(on * nn_, axis=1)
    denom = jnp.maximum(
        jnp.linalg.norm(on, axis=1) * jnp.linalg.norm(nn_, axis=1), _COS_EPS)
    return jnp.mean(1.0 - dot / denom)


def _vmem_budget_bytes():
    """Generation-aware usable VMEM budget for the pipelined blocks."""
    try:
        cap = int(pltpu.get_tpu_info().vmem_capacity_bytes)
    except Exception:                  # interpret mode / API drift: be safe
        cap = 64 << 20
    if cap >= (100 << 20):             # v5e / v6e: 128 MiB physical
        return 96 << 20
    # v7x: 64 MiB physical per TC -> leave headroom for outputs + scratch.
    return min(48 << 20, (cap * 3) // 4)


def _pick_tile_n(n, d, itemsize, vmem_budget, max_tile_n=None):
    """Byte-budget-driven row-tile size (multiple of 8 unless full extent)."""
    # 2 inputs x 2 pipeline buffers per block; keep each input block in the
    # ~2-8 MiB roofline-saturating window.
    block_budget = max(_MIN_BLOCK_BYTES, min(_MAX_BLOCK_BYTES, vmem_budget // 6))
    rows = block_budget // max(1, d * itemsize)
    if rows >= n:
        tile_n = n                             # single full-extent block
    else:
        tile_n = max(8, (rows // 8) * 8)
    if max_tile_n is not None and n > max_tile_n:
        tile_n = max(8, min(tile_n, (max_tile_n // 8) * 8))
    # Megacore (v7x has 2 TCs): make the "parallel" grid axis >= 2 tiles when
    # the data is large enough to amortize the extra grid step.
    total_bytes = n * d * itemsize
    if tile_n == n and n >= 16 and total_bytes >= (2 << 20):
        tile_n = max(8, (((n + 1) // 2) // 8) * 8)
    return tile_n


def _cosine_feature_kernel(old_ref, new_ref, out_ref, *, n_rows, tile_n):
    i = pl.program_id(0)

    # Single VMEM read of each tile; explicit f32 upcast at vreg level so
    # bf16 inputs match the f32 reference (free in a memory-bound kernel).
    old = old_ref[...].astype(jnp.float32)          # (TILE_N, D)
    new = new_ref[...].astype(jnp.float32)

    # All three row reductions are formed from the same loaded vregs
    # (one pass over the tile); accumulation stays in f32.
    ss_old = jnp.sum(old * old, axis=1, keepdims=True)
    ss_new = jnp.sum(new * new, axis=1, keepdims=True)
    dot = jnp.sum(old * new, axis=1, keepdims=True)

    # F.normalize clamp: 1 / max(||x||, eps) == min(rsqrt(ss), 1/eps).
    inv_o = jnp.minimum(jax.lax.rsqrt(ss_old), 1.0 / _NORM_EPS)
    inv_n = jnp.minimum(jax.lax.rsqrt(ss_new), 1.0 / _NORM_EPS)

    # Norms of the *normalized* rows (1.0, or 0.0 for all-zero rows).
    na = jnp.sqrt(ss_old) * inv_o
    nb = jnp.sqrt(ss_new) * inv_n

    cos = (dot * inv_o * inv_n) / jnp.maximum(na * nb, _COS_EPS)
    per_row = 1.0 - cos                              # (TILE_N, 1)

    # Mask the garbage-padded rows of the last (partial) tile.
    row = jax.lax.broadcasted_iota(jnp.int32, per_row.shape, 0) + i * tile_n
    per_row = jnp.where(row < n_rows, per_row, 0.0)

    partial = jnp.sum(per_row)                       # scalar partial of (1-cos)
    out_ref[...] = jnp.full(out_ref.shape, partial, dtype=jnp.float32)


def cosine_feature_loss(old_feat, new_feat, *, force_kernel=False,
                        max_tile_n=None):
    """old_feat, new_feat: (N, D) arrays. Returns scalar f32 loss."""
    assert old_feat.shape == new_feat.shape and old_feat.ndim == 2
    n, d = old_feat.shape
    itemsize = jnp.dtype(old_feat.dtype).itemsize
    per_array_bytes = n * d * itemsize

    # Tiny-input fast path: pallas_call fixed overhead dominates; XLA fuses
    # this trivially and is faster than any kernel.
    if not force_kernel and per_array_bytes < _FAST_PATH_BYTES:
        return _plain_jax_loss(old_feat, new_feat)

    vmem_budget = _vmem_budget_bytes()
    tile_n = _pick_tile_n(n, d, itemsize, vmem_budget, max_tile_n)

    # Extreme-D guard: even the minimal double-buffered block would not fit
    # the VMEM budget -> let XLA handle it instead of lying to the compiler.
    if 4 * tile_n * d * itemsize > vmem_budget:
        # TODO(synk): tile the feature dim with f32 running accumulators for
        # D larger than ~vmem_budget/(32*itemsize); plain-JAX fallback for now.
        return _plain_jax_loss(old_feat, new_feat)

    num_tiles = pl.cdiv(n, tile_n)
    # 2 inputs x 2 pipeline buffers + small outputs/scratch slack, clamped to
    # the generation-aware budget.
    vmem_limit = int(min(vmem_budget,
                         max(16 << 20, 4 * tile_n * d * itemsize + (2 << 20))))

    kernel = functools.partial(_cosine_feature_kernel, n_rows=n, tile_n=tile_n)

    partials = pl.pallas_call(
        kernel,
        out_shape=jax.ShapeDtypeStruct((num_tiles, 8, 128), jnp.float32),
        grid=(num_tiles,),
        in_specs=[
            pl.BlockSpec((tile_n, d), lambda i: (i, 0)),
            pl.BlockSpec((tile_n, d), lambda i: (i, 0)),
        ],
        out_specs=pl.BlockSpec((1, 8, 128), lambda i: (i, 0, 0)),
        compiler_params=pltpu.CompilerParams(
            dimension_semantics=("parallel",),
            vmem_limit_bytes=vmem_limit,
        ),
    )(old_feat, new_feat)

    # Tiny final reduction in plain JAX (every element of a block holds the
    # same per-tile partial; take element [0, 0] of each tile).
    return jnp.sum(partials[:, 0, 0]) / n


if __name__ == "__main__":
    key = jax.random.PRNGKey(0)
    k1, k2, k3, k4, k5, k6 = jax.random.split(key, 6)

    # Case 1: module-implied small scale (batch=8, hidden=32); force the kernel.
    old8 = jax.random.normal(k1, (8, 32), dtype=jnp.float32)
    new8 = jax.random.normal(k2, (8, 32), dtype=jnp.float32)
    loss = cosine_feature_loss(old8, new8, force_kernel=True)
    jax.block_until_ready(loss)
    ref = _plain_jax_loss(old8, new8)
    assert jnp.allclose(loss, ref, atol=1e-5, rtol=1e-5), (loss, ref)

    # Case 2: multi-tile grid + partial-last-tile masking (max_tile_n forces it).
    old20 = jax.random.normal(k3, (20, 160), dtype=jnp.float32)
    new20 = jax.random.normal(k4, (20, 160), dtype=jnp.float32)
    loss2 = cosine_feature_loss(old20, new20, force_kernel=True, max_tile_n=8)
    jax.block_until_ready(loss2)
    ref2 = _plain_jax_loss(old20, new20)
    assert jnp.allclose(loss2, ref2, atol=1e-5, rtol=1e-5), (loss2, ref2)

    # Case 3: bf16 inputs exercise the in-kernel f32 operand upcast.
    old16 = jax.random.normal(k5, (16, 128), dtype=jnp.float32).astype(jnp.bfloat16)
    new16 = jax.random.normal(k6, (16, 128), dtype=jnp.float32).astype(jnp.bfloat16)
    loss3 = cosine_feature_loss(old16, new16, force_kernel=True)
    jax.block_until_ready(loss3)
    ref3 = _plain_jax_loss(old16, new16)
    assert jnp.allclose(loss3, ref3, atol=1e-3, rtol=1e-3), (loss3, ref3)

    # Case 4: tiny-input auto path (plain-JAX fast path) still agrees.
    loss4 = cosine_feature_loss(old8, new8)
    jax.block_until_ready(loss4)
    assert jnp.allclose(loss4, ref, atol=1e-5, rtol=1e-5), (loss4, ref)

    print("KERNEL_OK")
</pallas_src>

<mosaic_0001>
module attributes {stable_mosaic.version = 11 : i64} {
  func.func @_cosine_feature_kernel(%arg0: i32, %arg1: memref<8x32xf32, #tpu.memory_space<vmem>>, %arg2: memref<8x32xf32, #tpu.memory_space<vmem>>, %arg3: memref<1x8x128xf32, #tpu.memory_space<vmem>>) attributes {dimension_semantics = [#tpu.dimension_semantics<parallel>], iteration_bounds = array<i64: 1>, scalar_prefetch = 0 : i64, scratch_operands = 0 : i64, tpu.core_type = #tpu.core_type<tc>, window_params = [{transform_indices = @transform_0, window_bounds = array<i64: 8, 32>}, {transform_indices = @transform_1, window_bounds = array<i64: 8, 32>}, {transform_indices = @transform_2, window_bounds = array<i64: 1, 8, 128>}]} {
    %c0 = arith.constant 0 : index
    %c0_0 = arith.constant 0 : index
    %0 = vector.load %arg1[%c0, %c0_0] : memref<8x32xf32, #tpu.memory_space<vmem>>, vector<8x32xf32>
    %c0_1 = arith.constant 0 : index
    %c0_2 = arith.constant 0 : index
    %1 = vector.load %arg2[%c0_1, %c0_2] : memref<8x32xf32, #tpu.memory_space<vmem>>, vector<8x32xf32>
    %2 = arith.mulf %0, %0 : vector<8x32xf32>
    %cst = arith.constant dense<0.000000e+00> : vector<8xf32>
    %3 = vector.multi_reduction <add>, %2, %cst [1] : vector<8x32xf32> to vector<8xf32>
    %4 = vector.shape_cast %3 : vector<8xf32> to vector<8x1xf32>
    %5 = arith.mulf %1, %1 : vector<8x32xf32>
    %cst_3 = arith.constant dense<0.000000e+00> : vector<8xf32>
    %6 = vector.multi_reduction <add>, %5, %cst_3 [1] : vector<8x32xf32> to vector<8xf32>
    %7 = vector.shape_cast %6 : vector<8xf32> to vector<8x1xf32>
    %8 = arith.mulf %0, %1 : vector<8x32xf32>
    %cst_4 = arith.constant dense<0.000000e+00> : vector<8xf32>
    %9 = vector.multi_reduction <add>, %8, %cst_4 [1] : vector<8x32xf32> to vector<8xf32>
    %10 = vector.shape_cast %9 : vector<8xf32> to vector<8x1xf32>
    %11 = math.rsqrt %4 : vector<8x1xf32>
    %cst_5 = arith.constant 9.99999995E+11 : f32
    %12 = vector.broadcast %cst_5 : f32 to vector<8x1xf32>
    %13 = arith.minimumf %11, %12 : vector<8x1xf32>
    %14 = math.rsqrt %7 : vector<8x1xf32>
    %cst_6 = arith.constant 9.99999995E+11 : f32
    %15 = vector.broadcast %cst_6 : f32 to vector<8x1xf32>
    %16 = arith.minimumf %14, %15 : vector<8x1xf32>
    %17 = math.sqrt %4 : vector<8x1xf32>
    %18 = arith.mulf %17, %13 : vector<8x1xf32>
    %19 = math.sqrt %7 : vector<8x1xf32>
    %20 = arith.mulf %19, %16 : vector<8x1xf32>
    %21 = arith.mulf %10, %13 : vector<8x1xf32>
    %22 = arith.mulf %21, %16 : vector<8x1xf32>
    %23 = arith.mulf %18, %20 : vector<8x1xf32>
    %cst_7 = arith.constant 9.99999993E-9 : f32
    %24 = vector.broadcast %cst_7 : f32 to vector<8x1xf32>
    %25 = arith.maximumf %23, %24 : vector<8x1xf32>
    %26 = arith.divf %22, %25 : vector<8x1xf32>
    %cst_8 = arith.constant 1.000000e+00 : f32
    %27 = vector.broadcast %cst_8 : f32 to vector<8x1xf32>
    %28 = arith.subf %27, %26 : vector<8x1xf32>
    %29 = tpu.iota {dimensions = array<i32: 0>} : vector<8x1xi32>
    %c8_i32 = arith.constant 8 : i32
    %30 = arith.muli %arg0, %c8_i32 : i32
    %31 = vector.broadcast %30 : i32 to vector<8x1xi32>
    %32 = arith.addi %29, %31 : vector<8x1xi32>
    %c8_i32_9 = arith.constant 8 : i32
    %33 = vector.broadcast %c8_i32_9 : i32 to vector<8x1xi32>
    %34 = arith.cmpi slt, %32, %33 : vector<8x1xi32>
    %cst_10 = arith.constant 0.000000e+00 : f32
    %35 = vector.broadcast %cst_10 : f32 to vector<8x1xf32>
    %36 = arith.select %34, %28, %35 : vector<8x1xi1>, vector<8x1xf32>
    %37 = vector.shape_cast %36 : vector<8x1xf32> to vector<1x8x1xf32>
    %cst_11 = arith.constant dense<0.000000e+00> : vector<1xf32>
    %38 = vector.multi_reduction <add>, %37, %cst_11 [1, 2] : vector<1x8x1xf32> to vector<1xf32>
    %39 = vector.shape_cast %38 : vector<1xf32> to vector<1x1x1xf32>
    %40 = vector.extract %39[0, 0, 0] : f32 from vector<1x1x1xf32>
    %41 = vector.broadcast %40 : f32 to vector<1x8x128xf32>
    %c0_12 = arith.constant 0 : index
    %c0_13 = arith.constant 0 : index
    %c0_14 = arith.constant 0 : index
    %42 = vector.load %arg3[%c0_12, %c0_13, %c0_14] : memref<1x8x128xf32, #tpu.memory_space<vmem>>, vector<1x8x128xf32>
    tpu.vector_store %arg3[%c0_12, %c0_13, %c0_14], %41 {strides = array<i32>} : memref<1x8x128xf32, #tpu.memory_space<vmem>>, vector<1x8x128xf32>,
    return
  }
  func.func @transform_0(%arg0: i32) -> (i32, i32) {
    %c0_i32 = arith.constant 0 : i32
    %c0_i32_0 = arith.constant 0 : i32
    return %arg0, %c0_i32 : i32, i32
  }
  func.func @transform_1(%arg0: i32) -> (i32, i32) {
    %c0_i32 = arith.constant 0 : i32
    %c0_i32_0 = arith.constant 0 : i32
    return %arg0, %c0_i32 : i32, i32
  }
  func.func @transform_2(%arg0: i32) -> (i32, i32, i32) {
    %c0_i32 = arith.constant 0 : i32
    %c0_i32_0 = arith.constant 0 : i32
    %c0_i32_1 = arith.constant 0 : i32
    return %arg0, %c0_i32, %c0_i32_0 : i32, i32, i32
  }
}

</mosaic_0001>

<llo_original>
// kernel: tpu_custom_call.1
$region0: #{tpu_custom_call.1}
  #allocation0 [shape = 'u32[]', space=smem, size = 0x4, offset = 0x4, fixed_abs, tag = 'smem constant byte address 0x4 - core index']
  #allocation1 [shape = 'u32[144,128]{1,0:T(1,128)}', space=vmem, size = 0x12000, scoped, tag = 'internal scratch']
  %s0 = inlined_call_operand.hbm [shape: f32[8,32], index: 0, kind: input, shape index: {}]
  %s1 = inlined_call_operand.hbm [shape: f32[8,32], index: 1, kind: input, shape index: {}]
  %s2 = inlined_call_operand.hbm [shape: f32[1,8,128], index: 2, kind: output, shape index: {}]
  %s3 = sld [smem:[#allocation0]]
  $region26: #{tpu_custom_call.1} parent=0
    _
  %s5 = ssub.s32 1, %s3
  %s6 = scalar_select 0, %s5, %s3
  $region1: #{tpu_custom_call.1} parent=0
    #allocation2 [shape = 'u8[4096]{0}', space=vmem, size = 0x1000, scoped, tag = 'input window, operand 0, single buffered']
    #allocation3 [shape = 's32[1]{0}', space=sflag, size = 0x4, scoped, tag = 'scoped memory for tpu_custom_call.1']
    #allocation4 [shape = 's32[1]{0}', space=sflag, size = 0x4, scoped, tag = 'scoped memory for tpu_custom_call.1']
    #allocation5 [shape = 'u8[4096]{0}', space=vmem, size = 0x1000, scoped, tag = 'input window, operand 1, single buffered']
    #allocation6 [shape = 's32[1]{0}', space=sflag, size = 0x4, scoped, tag = 'scoped memory for tpu_custom_call.1']
    #allocation7 [shape = 'u8[4096]{0}', space=vmem, size = 0x1000, scoped, tag = 'output window, operand 0, single buffered']
    %7 = vsyncpa [#allocation3], 0
    %8 = vsyncpa [#allocation6], 0
    %9 = vsyncpa [#allocation4], 0
    // Predicated region
    $region2: #{tpu_custom_call.1} parent=1 // pred_check
      _
    $region3: #{tpu_custom_call.1} parent=1 // pred_check_branch
      %11 = sbr.rel (0) target = $region5
    $region4: #{tpu_custom_call.1} parent=1 // pred_region
      %s13 = ssub.s32 128, 128
      %14 = vsyncadd [#allocation3], %s13
      %s16 = sshll.u32 [#allocation2], 4
      %s17 = int_to_ptr.vmem [resolvable:$true] %s16
      %19 = dma.hbm_to_vmem [thread:$0]  %s0, 128, %s17, [#allocation3]
    $region5: #{tpu_custom_call.1} parent=1 // pred_fallthru
      _
    // Predicated region
    $region6: #{tpu_custom_call.1} parent=1 // pred_check
      _
    $region7: #{tpu_custom_call.1} parent=1 // pred_check_branch
      %21 = sbr.rel (0) target = $region9
    $region8: #{tpu_custom_call.1} parent=1 // pred_region
      %s23 = ssub.s32 128, 128
      %24 = vsyncadd [#allocation6], %s23
      %s26 = sshll.u32 [#allocation5], 4
      %s27 = int_to_ptr.vmem [resolvable:$true] %s26
      %29 = dma.hbm_to_vmem [thread:$0]  %s1, 128, %s27, [#allocation6]
    $region9: #{tpu_custom_call.1} parent=1 // pred_fallthru
      _
    // Predicated region
    $region10: #{tpu_custom_call.1} parent=1 // pred_check
      _
    $region11: #{tpu_custom_call.1} parent=1 // pred_check_branch
      %31 = sbr.rel (0) target = $region13
    $region12: #{tpu_custom_call.1} parent=1 // pred_region
      %32 = dma.done [#allocation3], 128
    $region13: #{tpu_custom_call.1} parent=1 // pred_fallthru
      _
    // Predicated region
    $region14: #{tpu_custom_call.1} parent=1 // pred_check
      _
    $region15: #{tpu_custom_call.1} parent=1 // pred_check_branch
      %34 = sbr.rel (0) target = $region17
    $region16: #{tpu_custom_call.1} parent=1 // pred_region
      %35 = dma.done [#allocation6], 128
    $region17: #{tpu_custom_call.1} parent=1 // pred_fallthru
      _
    %v36 = vld [vmem:[#allocation2] sm:$0xff]
    %v37 = vld [vmem:[#allocation5] sm:$0xff]
    %v38 = vmul.f32 %v36, %v36
    %vm39 = vcmask 261120
    %v40 = vsel %vm39, %v38, 0.0
    %41 = vadd.xlane.f32.xlu0 %v40
    %v42 = vpop.xlane.xlu0 %41
    %v43 = vmul.f32 %v37, %v37
    %v44 = vsel %vm39, %v43, 0.0
    %45 = vadd.xlane.f32.xlu0 %v44
    %v46 = vpop.xlane.xlu0 %45
    %v47 = vmul.f32 %v36, %v37
    %v48 = vsel %vm39, %v47, 0.0
    %49 = vadd.xlane.f32.xlu0 %v48
    %v50 = vpop.xlane.xlu0 %49
    %v51 = vrsqrt.pop %v42
    %v52 = vmin.f32 %v51, 1e+12
    %v53 = vrsqrt.pop %v46
    %v54 = vmin.f32 %v53, 1e+12
    %v55 = vrsqrt.pop %v42
    %v56 = vmul.f32 %v42, %v55
    %vm57 = vcmp.eq.f32.partialorder %v42, inf
    %v58 = vsel %vm57, %v42, %v56
    %vm59 = vcmp.eq.f32.partialorder %v42, 0.0
    %v60 = vand.u32 %v42, 2147483648
    %v61 = vsel %vm59, %v60, %v58
    %v62 = vmul.f32 %v61, %v52
    %v63 = vrsqrt.pop %v46
    %v64 = vmul.f32 %v46, %v63
    %vm65 = vcmp.eq.f32.partialorder %v46, inf
    %v66 = vsel %vm65, %v46, %v64
    %vm67 = vcmp.eq.f32.partialorder %v46, 0.0
    %v68 = vand.u32 %v46, 2147483648
    %v69 = vsel %vm67, %v68, %v66
    %v70 = vmul.f32 %v69, %v54
    %v71 = vmul.f32 %v50, %v52
    %v72 = vmul.f32 %v71, %v54
    %v73 = vmul.f32 %v62, %v70
    %v74 = vmax.f32 %v73, 1e-08
    %v75 = vrcp.pop %v74
    %v76 = vmul.f32 %v72, %v75
    %v77 = vsub.f32 1.0, %v76
    %v78 = vlaneseq
    %v79 = vshrl.u32 %v78, 7
    %s80 = smul.u32 0, 8
    %v81 = vstv %s80
    %v82 = vadd.s32 %v79, %v81
    %vm83 = vcmp.lt.s32.totalorder %v82, 8
    %v84 = vsel %vm83, %v77, 0.0
    %vm85 = vcmask 7168
    %v86 = vsel %vm85, %v84, 0.0
    %87 = vadd.xlane.f32.xlu0 %v86
    %v88 = vpop.xlane.xlu0 %87
    %v89 = vrot.slane %v88, 4
    %v90 = vadd.f32 %v88, %v89
    %v91 = vrot.slane %v90, 2
    %v92 = vadd.f32 %v90, %v91
    %v93 = vrot.slane %v92, 1
    %v94 = vadd.f32 %v92, %v93
    %s95 = vtos %v94
    %v96 = vstv %s95
    %97 = vst [vmem:[#allocation7] sm:$0xff] %v96
    // Predicated region
    $region18: #{tpu_custom_call.1} parent=1 // pred_check
      _
    $region19: #{tpu_custom_call.1} parent=1 // pred_check_branch
      %99 = sbr.rel (0) target = $region21
    $region20: #{tpu_custom_call.1} parent=1 // pred_region
      %s101 = ssub.s32 128, 128
      %102 = vsyncadd [#allocation4], %s101
      %s104 = sshll.u32 [#allocation7], 4
      %s105 = int_to_ptr.vmem [resolvable:$true] %s104
      %107 = dma.vmem_to_hbm [thread:$0]  %s105, 128, %s2, [#allocation4]
    $region21: #{tpu_custom_call.1} parent=1 // pred_fallthru
      _
    // Predicated region
    $region22: #{tpu_custom_call.1} parent=1 // pred_check
      _
    $region23: #{tpu_custom_call.1} parent=1 // pred_check_branch
      %109 = sbr.rel (0) target = $region25
    $region24: #{tpu_custom_call.1} parent=1 // pred_region
      %110 = dma.done [#allocation4], 128
    $region25: #{tpu_custom_call.1} parent=1 // pred_fallthru
      _
    %111 = vsyncpa [#allocation3], 1
    %112 = vsyncpa [#allocation6], 1
    %113 = vsyncpa [#allocation4], 1

</llo_original>
